<compile_context>
chip_gen: v6e
topology: v6e:2x2x1
jax: 0.10.0
libtpu: 0.0.40
codegen_flags: <defaults>
</compile_context>

<pallas_src>
import functools

import jax
import jax.numpy as jnp
from jax import lax
from jax.experimental import pallas as pl
from jax.experimental.pallas import tpu as pltpu
import numpy as np


def _instance_loss_kernel(zi_ref, zj_ref, out_ref, *, tm, batch_size, inv_temp):
    B = batch_size
    s = pl.program_id(0)
    n_half = B // tm                          # strips per half (static)
    first_half = s < n_half                   # traced scalar bool
    half_start = jnp.where(first_half, s, s - n_half) * tm
    if tm % 8 == 0:
        half_start = pl.multiple_of(half_start, 8)
    row0 = s * tm                             # global row offset of this strip

    # (tm, D) slices at the same offset in both halves: one is the strip's own
    # rows, the other holds the positive partners (sim[r, partner(r)]).
    a = zi_ref[pl.ds(half_start, tm), :]
    b = zj_ref[pl.ds(half_start, tm), :]
    z_strip = jnp.where(first_half, a, b)
    partner = jnp.where(first_half, b, a)

    # Fold 1/T into the LHS operand once (native dtype, reused for positives).
    z_strip = z_strip * jnp.asarray(inv_temp, z_strip.dtype)

    # Positive pairs for this strip: <z_scaled[r], z[partner(r)]> summed (f32 VPU).
    pos_sum = jnp.sum(z_strip.astype(jnp.float32) * partner.astype(jnp.float32))

    # (tm, N) similarity strip as two MXU matmuls against the resident halves,
    # accumulated in f32 (bf16-native MXU path when the caller holds bf16).
    dims = (((1,), (1,)), ((), ()))
    sim_i = lax.dot_general(z_strip, zi_ref[...], dims,
                            preferred_element_type=jnp.float32)   # cols [0, B)
    sim_j = lax.dot_general(z_strip, zj_ref[...], dims,
                            preferred_element_type=jnp.float32)   # cols [B, N)

    # Exclude self-similarity (column == global row).  Only one of the two half
    # strips ever contains the diagonal; the other compare selects nothing.
    # TODO(synk): restrict the select to the tm x tm diagonal sub-block per strip.
    grow = row0 + lax.broadcasted_iota(jnp.int32, (tm, B), 0)     # global row id
    gcol = lax.broadcasted_iota(jnp.int32, (tm, B), 1)            # global col id (1st half)
    neg_big = jnp.float32(-1e30)
    sim_i = jnp.where(gcol == grow, neg_big, sim_i)
    sim_j = jnp.where(gcol + B == grow, neg_big, sim_j)

    # Row-wise logsumexp over k != r (numerically stable, f32).
    row_max = jnp.maximum(jnp.max(sim_i, axis=1, keepdims=True),
                          jnp.max(sim_j, axis=1, keepdims=True))
    exp_sum = (jnp.sum(jnp.exp(sim_i - row_max), axis=1, keepdims=True)
               + jnp.sum(jnp.exp(sim_j - row_max), axis=1, keepdims=True))
    lse = jnp.log(exp_sum) + row_max                              # (tm, 1)

    # Per-strip partial cross-entropy sum (division by N happens once, outside).
    out_ref[s, 0] = jnp.sum(lse) - pos_sum


def _pick_row_block(batch_size, cap=256):
    """Largest divisor of batch_size <= cap, preferring sublane-aligned (x8) ones."""
    cap = min(batch_size, cap)
    start = cap - cap % 8
    for tm in range(start, 0, -8):
        if batch_size % tm == 0:
            return tm
    for tm in range(cap, 0, -1):
        if batch_size % tm == 0:
            return tm
    return batch_size


def instance_loss(z_i, z_j, temperature, *, row_block=None):
    """z_i, z_j: (batch_size, dim) embeddings of the two augmented views."""
    B, D = z_i.shape
    assert z_j.shape == (B, D)
    N = 2 * B
    tm = row_block if row_block is not None else _pick_row_block(B)
    assert B % tm == 0, "row block must divide batch_size"
    num_strips = N // tm

    kernel = functools.partial(
        _instance_loss_kernel, tm=tm, batch_size=int(B),
        inv_temp=1.0 / float(temperature))

    # VMEM budget: resident z_i/z_j + f32 strip temporaries (sim halves + exp).
    # v7x has 64 MiB physical VMEM (v5e/v6e: 128 MiB); stay under the smaller one.
    isz = jnp.dtype(z_i.dtype).itemsize
    est = 2 * B * D * isz + 6 * tm * N * 4 + (2 << 20)
    vmem_limit = int(max(16 << 20, min(est, 48 << 20)))

    partials = pl.pallas_call(
        kernel,
        out_shape=jax.ShapeDtypeStruct((num_strips, 1), jnp.float32),
        grid=(num_strips,),
        in_specs=[pl.BlockSpec(memory_space=pltpu.MemorySpace.VMEM),
                  pl.BlockSpec(memory_space=pltpu.MemorySpace.VMEM)],
        out_specs=pl.BlockSpec(memory_space=pltpu.MemorySpace.SMEM),
        compiler_params=pltpu.CompilerParams(
            dimension_semantics=("arbitrary",),
            vmem_limit_bytes=vmem_limit),
    )(z_i, z_j)
    # TODO(synk): on v7x megacore, emit per-strip partials to a lane-dense VMEM
    # output and mark the strip axis "parallel" to shard strips across the 2 TCs.
    return jnp.sum(partials) * jnp.float32(1.0 / N)


def _reference(z_i, z_j, batch_size, temperature):
    """Pure numpy (float64) re-implementation of the PyTorch forward."""
    z_i = np.asarray(z_i, np.float64)
    z_j = np.asarray(z_j, np.float64)
    N = 2 * batch_size
    z = np.concatenate([z_i, z_j], axis=0)
    sim = (z @ z.T) / temperature
    sim_i_j = np.diag(sim, batch_size)
    sim_j_i = np.diag(sim, -batch_size)
    pos = np.concatenate([sim_i_j, sim_j_i]).reshape(N, 1)
    mask = np.ones((N, N), dtype=bool)
    np.fill_diagonal(mask, False)
    for i in range(batch_size):
        mask[i, batch_size + i] = False
        mask[batch_size + i, i] = False
    neg = sim[mask].reshape(N, -1)
    logits = np.concatenate([pos, neg], axis=1)
    m = logits.max(axis=1, keepdims=True)
    lse = np.log(np.exp(logits - m).sum(axis=1)) + m[:, 0]
    loss = (lse - logits[:, 0]).sum() / N
    return loss


if __name__ == "__main__":
    batch_size = 16
    dim = 32
    temperature = 0.5

    key = jax.random.PRNGKey(0)
    k1, k2 = jax.random.split(key)
    # Two augmented views (L2-normalized as a SimCLR-style head would produce;
    # the loss module itself does not normalize).  Native dtype fed straight in.
    z_i = jax.random.normal(k1, (batch_size, dim), jnp.float32)
    z_j = jax.random.normal(k2, (batch_size, dim), jnp.float32)
    z_i = z_i / jnp.linalg.norm(z_i, axis=1, keepdims=True)
    z_j = z_j / jnp.linalg.norm(z_j, axis=1, keepdims=True)

    out = jax.block_until_ready(instance_loss(z_i, z_j, temperature))

    ref = _reference(z_i, z_j, batch_size, temperature)
    assert np.allclose(float(out), float(ref), rtol=1e-3, atol=1e-3), (float(out), float(ref))

    print("KERNEL_OK")
</pallas_src>

<mosaic_0001>
module attributes {stable_mosaic.version = 11 : i64} {
  func.func @_instance_loss_kernel(%arg0: i32, %arg1: memref<16x32xf32, #tpu.memory_space<vmem>>, %arg2: memref<16x32xf32, #tpu.memory_space<vmem>>, %arg3: memref<2x1xf32, #tpu.memory_space<smem>>) attributes {dimension_semantics = [#tpu.dimension_semantics<arbitrary>], iteration_bounds = array<i64: 2>, scalar_prefetch = 0 : i64, scratch_operands = 0 : i64, tpu.core_type = #tpu.core_type<tc>, window_params = [{pipeline_mode = #tpu.pipeline_mode<synchronous>, transform_indices = @transform_0, window_bounds = array<i64: 16, 32>}, {pipeline_mode = #tpu.pipeline_mode<synchronous>, transform_indices = @transform_1, window_bounds = array<i64: 16, 32>}, {transform_indices = @transform_2, window_bounds = array<i64: 2, 1>}]} {
    %c1_i32 = arith.constant 1 : i32
    %0 = arith.cmpi slt, %arg0, %c1_i32 : i32
    %c1_i32_0 = arith.constant 1 : i32
    %1 = arith.subi %arg0, %c1_i32_0 : i32
    %2 = arith.select %0, %arg0, %1 : i32
    %c16_i32 = arith.constant 16 : i32
    %3 = arith.muli %2, %c16_i32 : i32
    %4 = tpu.assume_multiple %3, 8 : i32
    %c16_i32_1 = arith.constant 16 : i32
    %5 = arith.muli %arg0, %c16_i32_1 : i32
    %6 = arith.index_cast %4 : i32 to index
    %c0 = arith.constant 0 : index
    %7 = vector.load %arg1[%6, %c0] : memref<16x32xf32, #tpu.memory_space<vmem>>, vector<16x32xf32>
    %8 = arith.index_cast %4 : i32 to index
    %c0_2 = arith.constant 0 : index
    %9 = vector.load %arg2[%8, %c0_2] : memref<16x32xf32, #tpu.memory_space<vmem>>, vector<16x32xf32>
    %10 = arith.select %0, %7, %9 : vector<16x32xf32>
    %11 = arith.select %0, %9, %7 : vector<16x32xf32>
    %cst = arith.constant 2.000000e+00 : f32
    %12 = vector.broadcast %cst : f32 to vector<16x32xf32>
    %13 = arith.mulf %10, %12 : vector<16x32xf32>
    %14 = arith.mulf %13, %11 : vector<16x32xf32>
    %15 = vector.shape_cast %14 : vector<16x32xf32> to vector<1x16x32xf32>
    %cst_3 = arith.constant dense<0.000000e+00> : vector<1xf32>
    %16 = vector.multi_reduction <add>, %15, %cst_3 [1, 2] : vector<1x16x32xf32> to vector<1xf32>
    %17 = vector.shape_cast %16 : vector<1xf32> to vector<1x1x1xf32>
    %18 = vector.extract %17[0, 0, 0] : f32 from vector<1x1x1xf32>
    %c0_4 = arith.constant 0 : index
    %c0_5 = arith.constant 0 : index
    %19 = vector.load %arg1[%c0_4, %c0_5] : memref<16x32xf32, #tpu.memory_space<vmem>>, vector<16x32xf32>
    %cst_6 = arith.constant dense<0.000000e+00> : vector<16x16xf32>
    %20 = tpu.matmul %13, %19, %cst_6 {dimension_numbers = #tpu.dot_dimension_numbers<[1], [1], [0], [0], [0, 0, 1, 0], [], []>} : vector<16x32xf32>, vector<16x32xf32>, vector<16x16xf32> -> vector<16x16xf32>
    %c0_7 = arith.constant 0 : index
    %c0_8 = arith.constant 0 : index
    %21 = vector.load %arg2[%c0_7, %c0_8] : memref<16x32xf32, #tpu.memory_space<vmem>>, vector<16x32xf32>
    %cst_9 = arith.constant dense<0.000000e+00> : vector<16x16xf32>
    %22 = tpu.matmul %13, %21, %cst_9 {dimension_numbers = #tpu.dot_dimension_numbers<[1], [1], [0], [0], [0, 0, 1, 0], [], []>} : vector<16x32xf32>, vector<16x32xf32>, vector<16x16xf32> -> vector<16x16xf32>
    %23 = tpu.iota {dimensions = array<i32: 0>} : vector<16x16xi32>
    %24 = vector.broadcast %5 : i32 to vector<16x16xi32>
    %25 = arith.addi %24, %23 : vector<16x16xi32>
    %26 = tpu.iota {dimensions = array<i32: 1>} : vector<16x16xi32>
    %27 = arith.cmpi eq, %26, %25 : vector<16x16xi32>
    %cst_10 = arith.constant -1.000000e+30 : f32
    %28 = vector.broadcast %cst_10 : f32 to vector<16x16xf32>
    %29 = arith.select %27, %28, %20 : vector<16x16xi1>, vector<16x16xf32>
    %c16_i32_11 = arith.constant 16 : i32
    %30 = vector.broadcast %c16_i32_11 : i32 to vector<16x16xi32>
    %31 = arith.addi %26, %30 : vector<16x16xi32>
    %32 = arith.cmpi eq, %31, %25 : vector<16x16xi32>
    %cst_12 = arith.constant -1.000000e+30 : f32
    %33 = vector.broadcast %cst_12 : f32 to vector<16x16xf32>
    %34 = arith.select %32, %33, %22 : vector<16x16xi1>, vector<16x16xf32>
    %cst_13 = arith.constant dense<0xFF800000> : vector<16xf32>
    %35 = vector.multi_reduction <maximumf>, %29, %cst_13 [1] : vector<16x16xf32> to vector<16xf32>
    %36 = vector.shape_cast %35 : vector<16xf32> to vector<16x1xf32>
    %cst_14 = arith.constant dense<0xFF800000> : vector<16xf32>
    %37 = vector.multi_reduction <maximumf>, %34, %cst_14 [1] : vector<16x16xf32> to vector<16xf32>
    %38 = vector.shape_cast %37 : vector<16xf32> to vector<16x1xf32>
    %39 = arith.maximumf %36, %38 : vector<16x1xf32>
    %40 = vector.broadcast %39 : vector<16x1xf32> to vector<16x16xf32>
    %41 = arith.subf %29, %40 : vector<16x16xf32>
    %42 = math.exp %41 : vector<16x16xf32>
    %cst_15 = arith.constant dense<0.000000e+00> : vector<16xf32>
    %43 = vector.multi_reduction <add>, %42, %cst_15 [1] : vector<16x16xf32> to vector<16xf32>
    %44 = vector.shape_cast %43 : vector<16xf32> to vector<16x1xf32>
    %45 = vector.broadcast %39 : vector<16x1xf32> to vector<16x16xf32>
    %46 = arith.subf %34, %45 : vector<16x16xf32>
    %47 = math.exp %46 : vector<16x16xf32>
    %cst_16 = arith.constant dense<0.000000e+00> : vector<16xf32>
    %48 = vector.multi_reduction <add>, %47, %cst_16 [1] : vector<16x16xf32> to vector<16xf32>
    %49 = vector.shape_cast %48 : vector<16xf32> to vector<16x1xf32>
    %50 = arith.addf %44, %49 : vector<16x1xf32>
    %51 = math.log %50 : vector<16x1xf32>
    %52 = arith.addf %51, %39 : vector<16x1xf32>
    %53 = vector.shape_cast %52 : vector<16x1xf32> to vector<1x16x1xf32>
    %cst_17 = arith.constant dense<0.000000e+00> : vector<1xf32>
    %54 = vector.multi_reduction <add>, %53, %cst_17 [1, 2] : vector<1x16x1xf32> to vector<1xf32>
    %55 = vector.shape_cast %54 : vector<1xf32> to vector<1x1x1xf32>
    %56 = vector.extract %55[0, 0, 0] : f32 from vector<1x1x1xf32>
    %57 = arith.subf %56, %18 : f32
    %58 = arith.index_cast %arg0 : i32 to index
    %c0_18 = arith.constant 0 : index
    %59 = memref.load %arg3[%58, %c0_18] : memref<2x1xf32, #tpu.memory_space<smem>>
    memref.store %57, %arg3[%58, %c0_18] : memref<2x1xf32, #tpu.memory_space<smem>>
    return
  }
  func.func @transform_0(%arg0: i32) -> (i32, i32) {
    %c0_i32 = arith.constant 0 : i32
    %c0_i32_0 = arith.constant 0 : i32
    %c0_i32_1 = arith.constant 0 : i32
    return %c0_i32, %c0_i32_0 : i32, i32
  }
  func.func @transform_1(%arg0: i32) -> (i32, i32) {
    %c0_i32 = arith.constant 0 : i32
    %c0_i32_0 = arith.constant 0 : i32
    %c0_i32_1 = arith.constant 0 : i32
    return %c0_i32, %c0_i32_0 : i32, i32
  }
  func.func @transform_2(%arg0: i32) -> (i32, i32) {
    %c0_i32 = arith.constant 0 : i32
    %c0_i32_0 = arith.constant 0 : i32
    %c0_i32_1 = arith.constant 0 : i32
    return %c0_i32, %c0_i32_0 : i32, i32
  }
}

</mosaic_0001>

<llo_original>
// kernel: tpu_custom_call.1
$region0: #{tpu_custom_call.1}
  #allocation0 [shape = 'u32[]', space=smem, size = 0x4, offset = 0x4, fixed_abs, tag = 'smem constant byte address 0x4 - core index']
  #allocation1 [shape = 'u32[144,128]{1,0:T(1,128)}', space=vmem, size = 0x12000, scoped, tag = 'internal scratch']
  %s0 = inlined_call_operand.hbm [shape: f32[16,32], index: 0, kind: input, shape index: {}]
  %s1 = inlined_call_operand.hbm [shape: f32[16,32], index: 1, kind: input, shape index: {}]
  %s2 = inlined_call_operand.vmem [shape: f32[2,1], index: 2, kind: output, shape index: {}]
  %s3 = sld [smem:[#allocation0]]
  $region49: #{tpu_custom_call.1} parent=0
    _
  %s5 = ssub.s32 1, %s3
  %s6 = scalar_select 0, %s5, %s3
  $region1: #{tpu_custom_call.1} parent=0
    #allocation2 [shape = 'u8[8192]{0}', space=vmem, size = 0x2000, scoped, tag = 'input window, operand 0, single buffered']
    #allocation3 [shape = 's32[2]{0}', space=sflag, size = 0x8, scoped, tag = 'scoped memory for tpu_custom_call.1']
    #allocation4 [shape = 's32[2]{0}', space=sflag, size = 0x8, scoped, tag = 'scoped memory for tpu_custom_call.1']
    #allocation5 [shape = 'u8[8192]{0}', space=vmem, size = 0x2000, scoped, tag = 'input window, operand 1, single buffered']
    #allocation6 [shape = 's32[1]{0}', space=sflag, size = 0x4, scoped, tag = 'scoped memory for tpu_custom_call.1']
    #allocation7 [shape = 'u8[1024]{0}', space=smem, size = 0x400, scoped, tag = 'output window, operand 0, single buffered']
    %7 = vsyncpa [#allocation3], 0
    %8 = vsyncpa [#allocation6], 0
    %9 = vsyncpa [#allocation4], 0
    loop: start=0, step=1, limit=4
    $region2: #{tpu_custom_call.1} parent=1 // loop_pre_header
      _
    $region3: #{tpu_custom_call.1} parent=1 // loop_header
      %s11 = sphi 0, %s15
      %p12 = scmp.ge.s32.totalorder %s11, 4
      %s19 = sphi 0, %s19
      %s21 = sphi 0, %s19
      %s22 = sphi 0, %s21
      %s36 = sphi 0, %s22
      %s40 = sphi 0, %s40
      %s42 = sphi 0, %s40
      %s43 = sphi 0, %s42
      %s57 = sphi 0, %s43
      %s61 = sphi 0, %s61
      %s63 = sphi 0, %s61
      %s64 = sphi 0, %s63
      %s78 = sphi 0, %s64
    $region4: #{tpu_custom_call.1} parent=1 // loop_header_branch
      %14 = sbr.rel (%p12) target = $region8
    $region5: #{tpu_custom_call.1} parent=1 // loop_body
      %s16 = ssub.s32 %s11, 1
      %s17 = ssub.s32 %s11, 2
      %s18 = sadd.s32 %s11, 1
      %s20 = sadd.s32 %s19, 1
      %p23 = scmp.eq.s32.totalorder %s11, 1
      %p24 = scmp.ne.s32.totalorder %s19, %s21
      %p25 = scmp.eq.s32.totalorder %s11, 0
      %p26 = por %p24, %p25
      %p27 = scmp.ne.s32.totalorder %s19, %s21
      %p28 = scmp.eq.s32.totalorder %s16, 1
      %p29 = por %p27, %p28
      %p30 = scmp.ne.s32.totalorder %s21, %s22
      %p31 = scmp.eq.s32.totalorder %s16, 0
      %p32 = por %p30, %p31
      %p33 = scmp.ne.s32.totalorder %s21, %s22
      %p34 = scmp.eq.s32.totalorder %s17, 1
      %p35 = por %p33, %p34
      %p37 = scmp.ne.s32.totalorder %s22, %s36
      %p38 = scmp.eq.s32.totalorder %s17, 0
      %p39 = por %p37, %p38
      %s41 = sadd.s32 %s40, 1
      %p44 = scmp.eq.s32.totalorder %s11, 1
      %p45 = scmp.ne.s32.totalorder %s40, %s42
      %p46 = scmp.eq.s32.totalorder %s11, 0
      %p47 = por %p45, %p46
      %p48 = scmp.ne.s32.totalorder %s40, %s42
      %p49 = scmp.eq.s32.totalorder %s16, 1
      %p50 = por %p48, %p49
      %p51 = scmp.ne.s32.totalorder %s42, %s43
      %p52 = scmp.eq.s32.totalorder %s16, 0
      %p53 = por %p51, %p52
      %p54 = scmp.ne.s32.totalorder %s42, %s43
      %p55 = scmp.eq.s32.totalorder %s17, 1
      %p56 = por %p54, %p55
      %p58 = scmp.ne.s32.totalorder %s43, %s57
      %p59 = scmp.eq.s32.totalorder %s17, 0
      %p60 = por %p58, %p59
      %s62 = sadd.s32 %s61, 1
      %p65 = scmp.eq.s32.totalorder %s11, 1
      %p66 = scmp.ne.s32.totalorder %s61, %s63
      %p67 = scmp.eq.s32.totalorder %s11, 0
      %p68 = por %p66, %p67
      %p69 = scmp.ne.s32.totalorder %s61, %s63
      %p70 = scmp.eq.s32.totalorder %s16, 1
      %p71 = por %p69, %p70
      %p72 = scmp.ne.s32.totalorder %s63, %s64
      %p73 = scmp.eq.s32.totalorder %s16, 0
      %p74 = por %p72, %p73
      %p75 = scmp.ne.s32.totalorder %s63, %s64
      %p76 = scmp.eq.s32.totalorder %s17, 1
      %p77 = por %p75, %p76
      %p79 = scmp.ne.s32.totalorder %s64, %s78
      %p80 = scmp.eq.s32.totalorder %s17, 0
      %p81 = por %p79, %p80
      %p82 = scmp.le.s32.totalorder 1, %s11
      %p83 = scmp.lt.s32.totalorder %s11, 3
      %p84 = pnand %p82, %p83
      %p85 = pneg %p84
      // Predicated region
      $region9: #{tpu_custom_call.1} parent=5 // pred_check
        _
      $region10: #{tpu_custom_call.1} parent=5 // pred_check_branch
        %87 = sbr.rel (%p84) target = $region12
      $region11: #{tpu_custom_call.1} parent=5 // pred_region
        %s88 = ssub.s32 %s11, 1
        // Predicated region
        $region13: #{tpu_custom_call.1} parent=11 // pred_check
          %p89 = pneg %p32
        $region14: #{tpu_custom_call.1} parent=11 // pred_check_branch
          %91 = sbr.rel (%p89) target = $region16
        $region15: #{tpu_custom_call.1} parent=11 // pred_region
          %s93 = ssub.s32 256, 256
          %94 = vsyncadd [#allocation3], %s93
          %s95 = sshll.u32 [#allocation2], 4
          %s96 = int_to_ptr.vmem [resolvable:$true] %s95
          %101 = dma.hbm_to_vmem [thread:$0]  %s0, 256, %s96, [#allocation3], 128, 128, 8
        $region16: #{tpu_custom_call.1} parent=11 // pred_fallthru
          _
        // Predicated region
        $region17: #{tpu_custom_call.1} parent=11 // pred_check
          %p102 = pneg %p53
        $region18: #{tpu_custom_call.1} parent=11 // pred_check_branch
          %104 = sbr.rel (%p102) target = $region20
        $region19: #{tpu_custom_call.1} parent=11 // pred_region
          %s106 = ssub.s32 256, 256
          %107 = vsyncadd [#allocation6], %s106
          %s108 = sshll.u32 [#allocation5], 4
          %s109 = int_to_ptr.vmem [resolvable:$true] %s108
          %114 = dma.hbm_to_vmem [thread:$0]  %s1, 256, %s109, [#allocation6], 128, 128, 8
        $region20: #{tpu_custom_call.1} parent=11 // pred_fallthru
          _
      $region12: #{tpu_custom_call.1} parent=5 // pred_fallthru
        _
      %p115 = scmp.lt.s32.totalorder %s11, 2
      // Predicated region
      $region21: #{tpu_custom_call.1} parent=5 // pred_check
        %p116 = pneg %p115
      $region22: #{tpu_custom_call.1} parent=5 // pred_check_branch
        %118 = sbr.rel (%p116) target = $region24
      $region23: #{tpu_custom_call.1} parent=5 // pred_region
        _
      $region24: #{tpu_custom_call.1} parent=5 // pred_fallthru
        _
      %p119 = scmp.le.s32.totalorder 1, %s11
      %p120 = scmp.lt.s32.totalorder %s11, 3
      %p121 = pnand %p119, %p120
      %p122 = pneg %p121
      // Predicated region
      $region25: #{tpu_custom_call.1} parent=5 // pred_check
        _
      $region26: #{tpu_custom_call.1} parent=5 // pred_check_branch
        %124 = sbr.rel (%p121) target = $region28
      $region27: #{tpu_custom_call.1} parent=5 // pred_region
        %s125 = ssub.s32 %s11, 1
        // Predicated region
        $region29: #{tpu_custom_call.1} parent=27 // pred_check
          %p126 = pneg %p32
        $region30: #{tpu_custom_call.1} parent=27 // pred_check_branch
          %128 = sbr.rel (%p126) target = $region32
        $region31: #{tpu_custom_call.1} parent=27 // pred_region
          %129 = dma.done [#allocation3], 256
        $region32: #{tpu_custom_call.1} parent=27 // pred_fallthru
          _
        // Predicated region
        $region33: #{tpu_custom_call.1} parent=27 // pred_check
          %p130 = pneg %p53
        $region34: #{tpu_custom_call.1} parent=27 // pred_check_branch
          %132 = sbr.rel (%p130) target = $region36
        $region35: #{tpu_custom_call.1} parent=27 // pred_region
          %133 = dma.done [#allocation6], 256
        $region36: #{tpu_custom_call.1} parent=27 // pred_fallthru
          _
        %p134 = pneg %p32
        %p135 = pneg %p29
        %p136 = pneg %p53
        %p137 = pneg %p50
        %p138 = pneg %p74
        %p139 = pneg %p71
        %p140 = scmp.lt.s32.totalorder %s16, 1
        %s141 = ssub.s32 %s16, 1
        %s142 = scalar_select %p140, %s16, %s141
        %s143 = smul.u32 %s142, 16
        %s144 = smul.u32 %s16, 16
        %s145 = scalar_lea.vmem [#allocation2], %s143
        %v146 = vld [vmem:[%s145] sm:$0xff]
        %v147 = vld [vmem:[%s145 + $0x8] sm:$0xff]
        %s148 = scalar_lea.vmem [#allocation5], %s143
        %v149 = vld [vmem:[%s148] sm:$0xff]
        %v150 = vld [vmem:[%s148 + $0x8] sm:$0xff]
        %s151 = scalar_select %p140, 1, 0
        %v152 = vstv %s151
        %vm153 = vcmp.eq.s32.totalorder %v152, 1
        %v154 = vsel %vm153, %v146, %v149
        %v155 = vsel %vm153, %v147, %v150
        %v156 = vsel %vm153, %v149, %v146
        %v157 = vsel %vm153, %v150, %v147
        %v158 = vmul.f32 %v154, 2.0
        %v159 = vmul.f32 %v155, 2.0
        %v160 = vmul.f32 %v158, %v156
        %v161 = vmul.f32 %v159, %v157
        %vm162 = vcmask 261120
        %v163 = vsel %vm162, %v160, 0.0
        %v164 = vsel %vm162, %v161, 0.0
        %v165 = vadd.f32 %v163, %v164
        %166 = vadd.xlane.f32.xlu0 %v165
        %v167 = vpop.xlane.xlu0 %166
        %v168 = vrot.slane %v167, 4
        %v169 = vadd.f32 %v167, %v168
        %v170 = vrot.slane %v169, 2
        %v171 = vadd.f32 %v169, %v170
        %v172 = vrot.slane %v171, 1
        %v173 = vadd.f32 %v171, %v172
        %s174 = vtos %v173
        %v175 = vld [vmem:[#allocation2] sm:$0xff]
        %v176 = vld [vmem:[#allocation2 + $0x8] sm:$0xff]
        %v178 = vsel %vm162, %v158, 0
        %v181 = vsel %vm162, %v159, 0
        %v184 = vsel %vm162, %v175, 0
        %v187 = vsel %vm162, %v176, 0
        %189 = vmatprep.subr.mxu0 0.0
        %190 = vmatpush1.xpose.msra.mxu0 0.0
        %191 = vmatprep.subr.mxu0 0.0
        %192 = vmatpush1.xpose.msra.mxu0 0.0
        %193 = vmatprep.subr.mxu0 0.0
        %194 = vmatpush1.xpose.msra.mxu0 0.0
        %195 = vmatprep.subr.mxu0 0.0
        %196 = vmatpush1.xpose.msra.mxu0 0.0
        %197 = vmatprep.subr.mxu0 0.0
        %198 = vmatpush1.xpose.msra.mxu0 0.0
        %199 = vmatprep.subr.mxu0 0.0
        %200 = vmatpush1.xpose.msra.mxu0 0.0
        %201 = vmatprep.subr.mxu0 0.0
        %202 = vmatpush1.xpose.msra.mxu0 0.0
        %203 = vmatprep.subr.mxu0 0.0
        %204 = vmatpush1.xpose.msra.mxu0 0.0
        %205 = vmatprep.subr.mxu0 0.0
        %206 = vmatpush1.xpose.msra.mxu0 0.0
        %207 = vmatprep.subr.mxu0 0.0
        %208 = vmatpush1.xpose.msra.mxu0 0.0
        %209 = vmatprep.subr.mxu0 0.0
        %210 = vmatpush1.xpose.msra.mxu0 0.0
        %211 = vmatprep.subr.mxu0 0.0
        %212 = vmatpush1.xpose.msra.mxu0 0.0
        %213 = vmatprep.subr.mxu0 0.0
        %214 = vmatpush1.xpose.msra.mxu0 0.0
        %215 = vmatprep.subr.mxu0 0.0
        %216 = vmatpush1.xpose.msra.mxu0 0.0
        %217 = vmatprep.subr.mxu0 0.0
        %218 = vmatpush1.xpose.msra.mxu0 %v187
        %219 = vmatprep.subr.mxu0 0.0
        %220 = vmatpush1.xpose.msra.mxu0 %v184
        %221 = vmatprep.subr.mxu0 0.0
        %222 = vmatpush2.xpose.msra.mxu0 0.0
        %223 = vmatprep.subr.mxu0 0.0
        %224 = vmatpush2.xpose.msra.mxu0 0.0
        %225 = vmatprep.subr.mxu0 0.0
        %226 = vmatpush2.xpose.msra.mxu0 0.0
        %227 = vmatprep.subr.mxu0 0.0
        %228 = vmatpush2.xpose.msra.mxu0 0.0
        %229 = vmatprep.subr.mxu0 0.0
        %230 = vmatpush2.xpose.msra.mxu0 0.0
        %231 = vmatprep.subr.mxu0 0.0
        %232 = vmatpush2.xpose.msra.mxu0 0.0
        %233 = vmatprep.subr.mxu0 0.0
        %234 = vmatpush2.xpose.msra.mxu0 0.0
        %235 = vmatprep.subr.mxu0 0.0
        %236 = vmatpush2.xpose.msra.mxu0 0.0
        %237 = vmatprep.subr.mxu0 0.0
        %238 = vmatpush2.xpose.msra.mxu0 0.0
        %239 = vmatprep.subr.mxu0 0.0
        %240 = vmatpush2.xpose.msra.mxu0 0.0
        %241 = vmatprep.subr.mxu0 0.0
        %242 = vmatpush2.xpose.msra.mxu0 0.0
        %243 = vmatprep.subr.mxu0 0.0
        %244 = vmatpush2.xpose.msra.mxu0 0.0
        %245 = vmatprep.subr.mxu0 0.0
        %246 = vmatpush2.xpose.msra.mxu0 0.0
        %247 = vmatprep.subr.mxu0 0.0
        %248 = vmatpush2.xpose.msra.mxu0 0.0
        %249 = vmatprep.subr.mxu0 0.0
        %250 = vmatpush2.xpose.msra.mxu0 0.0
        %251 = vmatprep.subr.mxu0 0.0
        %252 = vmatpush2.xpose.msra.mxu0 0.0
        %253 = vmatprep.mubr.f32.mxu0 0.0
        %254 = vmatmul.mubr.f32.gmra.mxu0 %v178
        %v255 = vpop.f32.mrf.mxu0
        %v256 = vadd.f32 0.0, %v255
        %v257 = vpop.f32.mrf.mxu0
        %258 = vmatprep.mubr.f32.mxu0 0.0
        %259 = vmatmul.mubr.f32.gmra.mxu0 %v181
        %v260 = vpop.f32.mrf.mxu0
        %v261 = vadd.f32 0.0, %v260
        %v262 = vpop.f32.mrf.mxu0
        %263 = vdwg.mxu0
        %v264 = vld [vmem:[#allocation5] sm:$0xff]
        %v265 = vld [vmem:[#allocation5 + $0x8] sm:$0xff]
        %v267 = vsel %vm162, %v264, 0
        %v270 = vsel %vm162, %v265, 0
        %272 = vmatprep.subr.mxu0 0.0
        %273 = vmatpush1.xpose.msra.mxu0 0.0
        %274 = vmatprep.subr.mxu0 0.0
        %275 = vmatpush1.xpose.msra.mxu0 0.0
        %276 = vmatprep.subr.mxu0 0.0
        %277 = vmatpush1.xpose.msra.mxu0 0.0
        %278 = vmatprep.subr.mxu0 0.0
        %279 = vmatpush1.xpose.msra.mxu0 0.0
        %280 = vmatprep.subr.mxu0 0.0
        %281 = vmatpush1.xpose.msra.mxu0 0.0
        %282 = vmatprep.subr.mxu0 0.0
        %283 = vmatpush1.xpose.msra.mxu0 0.0
        %284 = vmatprep.subr.mxu0 0.0
        %285 = vmatpush1.xpose.msra.mxu0 0.0
        %286 = vmatprep.subr.mxu0 0.0
        %287 = vmatpush1.xpose.msra.mxu0 0.0
        %288 = vmatprep.subr.mxu0 0.0
        %289 = vmatpush1.xpose.msra.mxu0 0.0
        %290 = vmatprep.subr.mxu0 0.0
        %291 = vmatpush1.xpose.msra.mxu0 0.0
        %292 = vmatprep.subr.mxu0 0.0
        %293 = vmatpush1.xpose.msra.mxu0 0.0
        %294 = vmatprep.subr.mxu0 0.0
        %295 = vmatpush1.xpose.msra.mxu0 0.0
        %296 = vmatprep.subr.mxu0 0.0
        %297 = vmatpush1.xpose.msra.mxu0 0.0
        %298 = vmatprep.subr.mxu0 0.0
        %299 = vmatpush1.xpose.msra.mxu0 0.0
        %300 = vmatprep.subr.mxu0 0.0
        %301 = vmatpush1.xpose.msra.mxu0 %v270
        %302 = vmatprep.subr.mxu0 0.0
        %303 = vmatpush1.xpose.msra.mxu0 %v267
        %304 = vmatprep.subr.mxu0 0.0
        %305 = vmatpush2.xpose.msra.mxu0 0.0
        %306 = vmatprep.subr.mxu0 0.0
        %307 = vmatpush2.xpose.msra.mxu0 0.0
        %308 = vmatprep.subr.mxu0 0.0
        %309 = vmatpush2.xpose.msra.mxu0 0.0
        %310 = vmatprep.subr.mxu0 0.0
        %311 = vmatpush2.xpose.msra.mxu0 0.0
        %312 = vmatprep.subr.mxu0 0.0
        %313 = vmatpush2.xpose.msra.mxu0 0.0
        %314 = vmatprep.subr.mxu0 0.0
        %315 = vmatpush2.xpose.msra.mxu0 0.0
        %316 = vmatprep.subr.mxu0 0.0
        %317 = vmatpush2.xpose.msra.mxu0 0.0
        %318 = vmatprep.subr.mxu0 0.0
        %319 = vmatpush2.xpose.msra.mxu0 0.0
        %320 = vmatprep.subr.mxu0 0.0
        %321 = vmatpush2.xpose.msra.mxu0 0.0
        %322 = vmatprep.subr.mxu0 0.0
        %323 = vmatpush2.xpose.msra.mxu0 0.0
        %324 = vmatprep.subr.mxu0 0.0
        %325 = vmatpush2.xpose.msra.mxu0 0.0
        %326 = vmatprep.subr.mxu0 0.0
        %327 = vmatpush2.xpose.msra.mxu0 0.0
        %328 = vmatprep.subr.mxu0 0.0
        %329 = vmatpush2.xpose.msra.mxu0 0.0
        %330 = vmatprep.subr.mxu0 0.0
        %331 = vmatpush2.xpose.msra.mxu0 0.0
        %332 = vmatprep.subr.mxu0 0.0
        %333 = vmatpush2.xpose.msra.mxu0 0.0
        %334 = vmatprep.subr.mxu0 0.0
        %335 = vmatpush2.xpose.msra.mxu0 0.0
        %336 = vmatprep.mubr.f32.mxu0 0.0
        %337 = vmatmul.mubr.f32.gmra.mxu0 %v178
        %v338 = vpop.f32.mrf.mxu0
        %v339 = vadd.f32 0.0, %v338
        %v340 = vpop.f32.mrf.mxu0
        %341 = vmatprep.mubr.f32.mxu0 0.0
        %342 = vmatmul.mubr.f32.gmra.mxu0 %v181
        %v343 = vpop.f32.mrf.mxu0
        %v344 = vadd.f32 0.0, %v343
        %v345 = vpop.f32.mrf.mxu0
        %346 = vdwg.mxu0
        %v347 = vlaneseq
        %v348 = vshrl.u32 %v347, 7
        %v349 = vadd.s32 %v348, 8
        %v350 = vstv %s144
        %v351 = vadd.s32 %v350, %v348
        %v352 = vadd.s32 %v350, %v349
        %v353 = vlaneseq
        %v354 = vand.u32 %v353, 127
        %vm355 = vcmp.eq.s32.totalorder %v354, %v351
        %vm356 = vcmp.eq.s32.totalorder %v354, %v352
        %v357 = vsel %vm355, -1e+30, %v256
        %v358 = vsel %vm356, -1e+30, %v261
        %v359 = vadd.s32 %v354, 16
        %vm360 = vcmp.eq.s32.totalorder %v359, %v351
        %vm361 = vcmp.eq.s32.totalorder %v359, %v352
        %v362 = vsel %vm360, -1e+30, %v339
        %v363 = vsel %vm361, -1e+30, %v344
        %vm364 = vcmask 130048
        %v365 = vsel %vm364, %v357, -inf
        %366 = vmax.xlane.f32.xlu0 %v365
        %v367 = vpop.xlane.xlu0 %366
        %v368 = vsel %vm364, %v358, -inf
        %369 = vmax.xlane.f32.xlu0 %v368
        %v370 = vpop.xlane.xlu0 %369
        %v371 = vsel %vm364, %v362, -inf
        %372 = vmax.xlane.f32.xlu0 %v371
        %v373 = vpop.xlane.xlu0 %372
        %v374 = vsel %vm364, %v363, -inf
        %375 = vmax.xlane.f32.xlu0 %v374
        %v376 = vpop.xlane.xlu0 %375
        %v377 = vmax.f32 %v367, %v373
        %v378 = vmax.f32 %v370, %v376
        %v379 = vsub.f32 %v357, %v377
        %v380 = vsub.f32 %v358, %v378
        %v381 = vmul.f32 %v379, 1.442695
        %v382 = vpow.pop %v381
        %v383 = vmul.f32 %v380, 1.442695
        %v384 = vpow.pop %v383
        %v385 = vsel %vm364, %v382, 0.0
        %386 = vadd.xlane.f32.xlu0 %v385
        %v387 = vpop.xlane.xlu0 %386
        %v388 = vsel %vm364, %v384, 0.0
        %389 = vadd.xlane.f32.xlu0 %v388
        %v390 = vpop.xlane.xlu0 %389
        %v391 = vsub.f32 %v362, %v377
        %v392 = vsub.f32 %v363, %v378
        %v393 = vmul.f32 %v391, 1.442695
        %v394 = vpow.pop %v393
        %v395 = vmul.f32 %v392, 1.442695
        %v396 = vpow.pop %v395
        %v397 = vsel %vm364, %v394, 0.0
        %398 = vadd.xlane.f32.xlu0 %v397
        %v399 = vpop.xlane.xlu0 %398
        %v400 = vsel %vm364, %v396, 0.0
        %401 = vadd.xlane.f32.xlu0 %v400
        %v402 = vpop.xlane.xlu0 %401
        %v403 = vadd.f32 %v387, %v399
        %v404 = vadd.f32 %v390, %v402
        %v405 = vlog2.pop %v403
        %v406 = vmul.f32 %v405, 0.6931472
        %v407 = vlog2.pop %v404
        %v408 = vmul.f32 %v407, 0.6931472
        %v409 = vadd.f32 %v406, %v377
        %v410 = vadd.f32 %v408, %v378
        %vm411 = vcmask 7168
        %v412 = vsel %vm411, %v409, 0.0
        %v413 = vsel %vm411, %v410, 0.0
        %v414 = vadd.f32 %v412, %v413
        %415 = vadd.xlane.f32.xlu0 %v414
        %v416 = vpop.xlane.xlu0 %415
        %v417 = vrot.slane %v416, 4
        %v418 = vadd.f32 %v416, %v417
        %v419 = vrot.slane %v418, 2
        %v420 = vadd.f32 %v418, %v419
        %v421 = vrot.slane %v420, 1
        %v422 = vadd.f32 %v420, %v421
        %s423 = vtos %v422
        %s424 = ssub.f32 %s423, %s174
        %s425 = smul.u32 %s16, 128
        %s426 = scalar_lea.smem [#allocation7], %s425
        %427 = sst [smem:[%s426]] %s424
        // Predicated region
        $region37: #{tpu_custom_call.1} parent=27 // pred_check
          %p428 = pneg %p71
        $region38: #{tpu_custom_call.1} parent=27 // pred_check_branch
          %430 = sbr.rel (%p428) target = $region40
        $region39: #{tpu_custom_call.1} parent=27 // pred_region
          %s432 = ssub.s32 32, 32
          %433 = vsyncadd [#allocation4], %s432
          %s435 = sshll.u32 %s2, 4
          %s436 = int_to_ptr.vmem [resolvable:$true] %s435
          %438 = dma.smem_to_vmem [#allocation7], 32, %s436, [#allocation4]
        $region40: #{tpu_custom_call.1} parent=27 // pred_fallthru
          _
        // Predicated region
        $region41: #{tpu_custom_call.1} parent=27 // pred_check
          %p439 = pneg %p71
        $region42: #{tpu_custom_call.1} parent=27 // pred_check_branch
          %441 = sbr.rel (%p439) target = $region44
        $region43: #{tpu_custom_call.1} parent=27 // pred_region
          %442 = dma.done [#allocation4], 32
        $region44: #{tpu_custom_call.1} parent=27 // pred_fallthru
          _
        %443 = sfence
      $region28: #{tpu_custom_call.1} parent=5 // pred_fallthru
        _
      %p444 = scmp.le.s32.totalorder 2, %s11
      // Predicated region
      $region45: #{tpu_custom_call.1} parent=5 // pred_check
        %p445 = pneg %p444
      $region46: #{tpu_custom_call.1} parent=5 // pred_check_branch
        %447 = sbr.rel (%p445) target = $region48
      $region47: #{tpu_custom_call.1} parent=5 // pred_region
        %s448 = ssub.s32 %s11, 2
      $region48: #{tpu_custom_call.1} parent=5 // pred_fallthru
        _
    $region6: #{tpu_custom_call.1} parent=1 // loop_footer
      %s15 = sadd.s32 1, %s11
    $region7: #{tpu_custom_call.1} parent=1 // loop_footer_branch
      %10 = sbr.rel target = $region3
    $region8: #{tpu_custom_call.1} parent=1 // loop_exit
      _
    %449 = vsyncpa [#allocation3], 1
    %s450 = scalar_lea.sflag [#allocation3], 1
    %451 = vsyncpa %s450, 1
    %452 = vsyncpa [#allocation6], 1
    %453 = vsyncpa [#allocation4], 1
    %s454 = scalar_lea.sflag [#allocation4], 1
    %455 = vsyncpa %s454, 1

</llo_original>
